<compile_context>
chip_gen: v5e
topology: v5e:2x2
jax: 0.10.0
libtpu: 0.0.40
codegen_flags: <defaults>
</compile_context>

<pallas_src>
import jax
import jax.numpy as jnp
from jax.experimental import pallas as pl
from jax.experimental.pallas import tpu as pltpu

LN_EPS = 1e-5  # PyTorch nn.LayerNorm default


def _silu(z):
    return z * jax.nn.sigmoid(z)


def _layer_norm(v, gamma, beta, inv_d):
    # Single-pass LayerNorm: var = E[x^2] - E[x]^2 (one cross-lane reduce pass).
    s1 = jnp.sum(v, axis=-1, keepdims=True)
    s2 = jnp.sum(v * v, axis=-1, keepdims=True)
    mu = s1 * inv_d
    var = jnp.maximum(s2 * inv_d - mu * mu, 0.0)
    return (v - mu) * jax.lax.rsqrt(var + LN_EPS) * gamma + beta


def mlpblock_kernel(
    x_ref,     # (TB, S, Din)  input x (before conct), f32 or bf16
    emb_ref,   # (TB, 1, D)    embed, f32 or bf16
    wc_ref,    # (Din, D)      conct weight, transposed
    we_ref,    # (D, D)        emb_fc weight, transposed
    w1_ref,    # (D, D)        fc1 weight, transposed
    w0t_ref,   # (S, S, 1)     fc0 conv weight, (s_in, s_out, 1)
    vec_ref,   # (6, D)        packed rows: bc+be, g0, bn0, g1, bn1, b1
    b0_ref,    # (S, 1)        fc0 bias
    out_ref,   # (TB, S, D)
):
    TB, S, Din = x_ref.shape
    D = out_ref.shape[-1]
    inv_d = 1.0 / D
    f32 = jnp.float32

    vecs = vec_ref[...].astype(f32)                      # (6, D)
    bce, g0, bn0, g1, bn1, b1 = (vecs[i:i + 1] for i in range(6))

    # ---- x = conct(x) + emb_fc(act(embed)) -------------------------------
    # One (TB*S, Din) @ (Din, D) MXU matmul; emb_fc stays on the tiny (TB, D)
    # tile.  Matmul operand dtypes come straight from the refs (bf16 path has
    # no per-step weight casts); accumulation is always f32.
    xc = jnp.dot(x_ref[...].reshape(TB * S, Din), wc_ref[...],
                 preferred_element_type=f32)             # (TB*S, D)
    emb = emb_ref[...].reshape(TB, D).astype(f32)
    e = jnp.dot(_silu(emb).astype(we_ref.dtype), we_ref[...],
                preferred_element_type=f32)              # (TB, D)
    e = e + bce                                          # fold bc+be on the small tile
    x3 = xc.reshape(TB, S, D) + e[:, None, :]            # single full-tile epilogue add

    # ---- x = x + act(fc0(norm0(x)))  (Conv1d k=1 over the seq axis) -------
    # Unrolled VPU weighted sum over the S input positions: each term is a
    # (TB,1,D) slice times a (1,S,1) weight column — no batched tiny matmuls,
    # no (TB,S,S) broadcast.
    xn3 = _layer_norm(x3, g0, bn0, inv_d)                # (TB, S, D)
    h3 = xn3[:, 0:1, :] * w0t_ref[0][None] + b0_ref[...][None]
    for s in range(1, S):
        h3 = h3 + xn3[:, s:s + 1, :] * w0t_ref[s][None]
    x3 = x3 + _silu(h3)

    # ---- x = x + act(fc1(norm1(x))) ---------------------------------------
    xn2 = _layer_norm(x3.reshape(TB * S, D), g1, bn1, inv_d)
    h2 = jnp.dot(xn2.astype(w1_ref.dtype), w1_ref[...],
                 preferred_element_type=f32) + b1        # (TB*S, D)
    x3 = x3 + _silu(h2).reshape(TB, S, D)

    out_ref[...] = x3.astype(out_ref.dtype)


def _pick_tb(B, S, Din, D, x_itemsize, tb=None, tb_cap=512, vmem_budget=16 << 20):
    """Batch tile: as large as the VMEM budget allows, but >=2 grid steps (v7x)."""
    if tb is not None:
        return max(1, min(int(tb), B))
    din_pad = pl.cdiv(Din, 128) * 128
    d_pad = pl.cdiv(D, 128) * 128
    # Per batch element: double-buffered x + double-buffered out + ~8 live
    # lane-padded f32 temporaries (x3, xn, h, xc, ...).
    per_b = S * (2 * din_pad * x_itemsize + 2 * d_pad * 4 + 8 * d_pad * 4)
    tb_fit = max(1, vmem_budget // per_b)
    tb_val = min(tb_cap, tb_fit, B)
    if B > 1 and tb_val >= B:          # keep >=2 grid steps for v7x's 2 TensorCores
        tb_val = pl.cdiv(B, 2)
    return max(1, int(tb_val))


def mlpblock_forward(x, embed, params, *, tb=None, bf16_matmul=False):
    """x: (B, S, Din), embed: (B, 1, D). Returns (x_out (B, S, D), embed)."""
    B, S, Din = x.shape
    D = embed.shape[-1]
    out_dtype = x.dtype
    f32 = jnp.float32

    # Stream x / embed / Linear weights in bf16 when requested (f32 accumulation
    # in-kernel); elementwise math stays f32 (v5e has no bf16 VPU).
    mm_dtype = jnp.bfloat16 if bf16_matmul else x.dtype
    x_in = x.astype(mm_dtype)
    emb_in = embed.astype(mm_dtype)
    wcT = params["wc"].T.astype(mm_dtype)           # (Din, D)
    weT = params["we"].T.astype(mm_dtype)           # (D, D)
    w1T = params["w1"].T.astype(mm_dtype)           # (D, D)

    # fc0 conv weight as (s_in, s_out, 1) so w0t[s] broadcasts across lanes.
    w0t = jnp.transpose(params["w0"].astype(f32)).reshape(S, S, 1)
    b0 = params["b0"].astype(f32).reshape(S, 1)
    # Packed (6, D) vector params; bc+be pre-summed in the wrapper.
    vec_pack = jnp.stack(
        [(params["bc"] + params["be"]).astype(f32),
         params["g0"].astype(f32), params["bn0"].astype(f32),
         params["g1"].astype(f32), params["bn1"].astype(f32),
         params["b1"].astype(f32)], axis=0)

    TB = _pick_tb(B, S, Din, D, x_in.dtype.itemsize, tb=tb)
    steps = pl.cdiv(B, TB)              # ragged last block: no wrapper jnp.pad

    # Explicit scoped-VMEM limit (v5e default is 16 MiB; keep under v7x's 64 MiB).
    din_pad = pl.cdiv(Din, 128) * 128
    d_pad = pl.cdiv(D, 128) * 128
    est = TB * S * (2 * din_pad * x_in.dtype.itemsize + 2 * d_pad * 4 + 8 * d_pad * 4)
    est += (din_pad + 2 * d_pad) * d_pad * 4 + (4 << 20)      # weights + slack
    vmem_limit = int(min(56 << 20, max(32 << 20, 2 * est)))

    def const_spec(shape):
        n = len(shape)
        return pl.BlockSpec(shape, lambda b, _n=n: (0,) * _n)

    out = pl.pallas_call(
        mlpblock_kernel,
        out_shape=jax.ShapeDtypeStruct((B, S, D), out_dtype),
        grid_spec=pltpu.PrefetchScalarGridSpec(
            num_scalar_prefetch=0,
            grid=(steps,),
            in_specs=[
                pl.BlockSpec((TB, S, Din), lambda b: (b, 0, 0)),
                pl.BlockSpec((TB, 1, D), lambda b: (b, 0, 0)),
                const_spec((Din, D)),
                const_spec((D, D)),
                const_spec((D, D)),
                const_spec((S, S, 1)),
                const_spec((6, D)),
                const_spec((S, 1)),
            ],
            out_specs=pl.BlockSpec((TB, S, D), lambda b: (b, 0, 0)),
        ),
        compiler_params=pltpu.CompilerParams(
            dimension_semantics=("parallel",),
            vmem_limit_bytes=vmem_limit,
        ),
    )(x_in, emb_in, wcT, weT, w1T, w0t, vec_pack, b0)

    return out, embed


def reference_forward(x, embed, params):
    """Pure-JAX reference matching the PyTorch module semantics."""
    def ln(v, g, b):
        mu = jnp.mean(v, axis=-1, keepdims=True)
        var = jnp.mean((v - mu) ** 2, axis=-1, keepdims=True)
        return (v - mu) / jnp.sqrt(var + LN_EPS) * g + b

    h = x @ params["wc"].T + params["bc"]
    e = _silu(embed) @ params["we"].T + params["be"]
    h = h + e
    t = ln(h, params["g0"], params["bn0"])
    t = jnp.einsum("os,bsd->bod", params["w0"], t) + params["b0"][None, :, None]
    h = h + _silu(t)
    t = ln(h, params["g1"], params["bn1"])
    t = t @ params["w1"].T + params["b1"]
    h = h + _silu(t)
    return h, embed


if __name__ == "__main__":
    B, S, D, STYLE = 2, 8, 32, 256
    DIN = 2 * D + STYLE  # first=True: conct input dim

    key = jax.random.PRNGKey(0)
    keys = jax.random.split(key, 16)
    f32 = jnp.float32

    params = {
        "wc": 0.02 * jax.random.normal(keys[0], (D, DIN), f32),
        "bc": 0.02 * jax.random.normal(keys[1], (D,), f32),
        "we": 0.02 * jax.random.normal(keys[2], (D, D), f32),
        "be": 0.02 * jax.random.normal(keys[3], (D,), f32),
        "w0": 0.02 * jax.random.normal(keys[4], (S, S), f32),  # Conv1d weight (S,S,1) squeezed
        "b0": 0.02 * jax.random.normal(keys[5], (S,), f32),
        "w1": 0.02 * jax.random.normal(keys[6], (D, D), f32),
        "b1": 0.02 * jax.random.normal(keys[7], (D,), f32),
        "g0": jnp.ones((D,), f32),
        "bn0": jnp.zeros((D,), f32),
        "g1": jnp.ones((D,), f32),
        "bn1": jnp.zeros((D,), f32),
    }

    x = jax.random.normal(keys[8], (B, S, DIN), f32)
    embed = jax.random.normal(keys[9], (B, 1, D), f32)

    # f32 path, auto-picked TB (grid of 2 steps even for tiny B).
    out, emb_out = mlpblock_forward(x, embed, params)
    out = jax.block_until_ready(out)
    ref, _ = reference_forward(x, embed, params)
    assert out.shape == (B, S, D)
    assert jnp.allclose(out, ref, atol=1e-4, rtol=1e-4), "mismatch vs reference"
    assert jnp.array_equal(emb_out, embed)

    # f32 path, ragged last block (no wrapper pad), auto TB.
    B2 = 33
    x2 = jax.random.normal(keys[10], (B2, S, DIN), f32)
    e2 = jax.random.normal(keys[11], (B2, 1, D), f32)
    out2, _ = mlpblock_forward(x2, e2, params)
    out2 = jax.block_until_ready(out2)
    ref2, _ = reference_forward(x2, e2, params)
    assert out2.shape == (B2, S, D)
    assert jnp.allclose(out2, ref2, atol=1e-4, rtol=1e-4), "mismatch vs reference (ragged)"

    # bf16-streamed path (x/embed/weights bf16, f32 accumulation): loose check.
    out3, _ = mlpblock_forward(x2, e2, params, bf16_matmul=True)
    out3 = jax.block_until_ready(out3)
    assert out3.shape == (B2, S, D) and out3.dtype == x2.dtype
    assert bool(jnp.isfinite(out3).all())
    assert float(jnp.max(jnp.abs(out3 - ref2))) < 0.25, "bf16 path diverged"

    print("KERNEL_OK")
</pallas_src>

<mosaic_0001>
module attributes {stable_mosaic.version = 11 : i64} {
  func.func @mlpblock_kernel(%arg0: i32, %arg1: memref<1x8x320xf32, #tpu.memory_space<vmem>>, %arg2: memref<1x1x32xf32, #tpu.memory_space<vmem>>, %arg3: memref<320x32xf32, #tpu.memory_space<vmem>>, %arg4: memref<32x32xf32, #tpu.memory_space<vmem>>, %arg5: memref<32x32xf32, #tpu.memory_space<vmem>>, %arg6: memref<8x8x1xf32, #tpu.memory_space<vmem>>, %arg7: memref<6x32xf32, #tpu.memory_space<vmem>>, %arg8: memref<8x1xf32, #tpu.memory_space<vmem>>, %arg9: memref<1x8x32xf32, #tpu.memory_space<vmem>>) attributes {dimension_semantics = [#tpu.dimension_semantics<parallel>], iteration_bounds = array<i64: 2>, scalar_prefetch = 0 : i64, scratch_operands = 0 : i64, tpu.core_type = #tpu.core_type<tc>, window_params = [{transform_indices = @transform_0, window_bounds = array<i64: 1, 8, 320>}, {transform_indices = @transform_1, window_bounds = array<i64: 1, 1, 32>}, {pipeline_mode = #tpu.pipeline_mode<synchronous>, transform_indices = @transform_2, window_bounds = array<i64: 320, 32>}, {pipeline_mode = #tpu.pipeline_mode<synchronous>, transform_indices = @transform_3, window_bounds = array<i64: 32, 32>}, {pipeline_mode = #tpu.pipeline_mode<synchronous>, transform_indices = @transform_4, window_bounds = array<i64: 32, 32>}, {pipeline_mode = #tpu.pipeline_mode<synchronous>, transform_indices = @transform_5, window_bounds = array<i64: 8, 8, 1>}, {pipeline_mode = #tpu.pipeline_mode<synchronous>, transform_indices = @transform_6, window_bounds = array<i64: 6, 32>}, {pipeline_mode = #tpu.pipeline_mode<synchronous>, transform_indices = @transform_7, window_bounds = array<i64: 8, 1>}, {transform_indices = @transform_8, window_bounds = array<i64: 1, 8, 32>}]} {
    %c0 = arith.constant 0 : index
    %c0_0 = arith.constant 0 : index
    %0 = vector.load %arg7[%c0, %c0_0] : memref<6x32xf32, #tpu.memory_space<vmem>>, vector<6x32xf32>
    %1 = vector.extract_strided_slice %0 {offsets = [0, 0], sizes = [1, 32], strides = [1, 1]} : vector<6x32xf32> to vector<1x32xf32>
    %2 = vector.extract_strided_slice %0 {offsets = [1, 0], sizes = [1, 32], strides = [1, 1]} : vector<6x32xf32> to vector<1x32xf32>
    %3 = vector.extract_strided_slice %0 {offsets = [2, 0], sizes = [1, 32], strides = [1, 1]} : vector<6x32xf32> to vector<1x32xf32>
    %4 = vector.extract_strided_slice %0 {offsets = [3, 0], sizes = [1, 32], strides = [1, 1]} : vector<6x32xf32> to vector<1x32xf32>
    %5 = vector.extract_strided_slice %0 {offsets = [4, 0], sizes = [1, 32], strides = [1, 1]} : vector<6x32xf32> to vector<1x32xf32>
    %6 = vector.extract_strided_slice %0 {offsets = [5, 0], sizes = [1, 32], strides = [1, 1]} : vector<6x32xf32> to vector<1x32xf32>
    %c0_1 = arith.constant 0 : index
    %c0_2 = arith.constant 0 : index
    %c0_3 = arith.constant 0 : index
    %7 = vector.load %arg1[%c0_1, %c0_2, %c0_3] : memref<1x8x320xf32, #tpu.memory_space<vmem>>, vector<1x8x320xf32>
    %8 = vector.shape_cast %7 : vector<1x8x320xf32> to vector<8x320xf32>
    %c0_4 = arith.constant 0 : index
    %c0_5 = arith.constant 0 : index
    %9 = vector.load %arg3[%c0_4, %c0_5] : memref<320x32xf32, #tpu.memory_space<vmem>>, vector<320x32xf32>
    %cst = arith.constant dense<0.000000e+00> : vector<8x32xf32>
    %10 = tpu.matmul %8, %9, %cst {dimension_numbers = #tpu.dot_dimension_numbers<[1], [0], [0], [1], [0, 0, 1, 1], [], []>} : vector<8x320xf32>, vector<320x32xf32>, vector<8x32xf32> -> vector<8x32xf32>
    %c0_6 = arith.constant 0 : index
    %c0_7 = arith.constant 0 : index
    %c0_8 = arith.constant 0 : index
    %11 = vector.load %arg2[%c0_6, %c0_7, %c0_8] : memref<1x1x32xf32, #tpu.memory_space<vmem>>, vector<1x1x32xf32>
    %12 = vector.shape_cast %11 : vector<1x1x32xf32> to vector<1x32xf32>
    %13 = arith.negf %12 : vector<1x32xf32>
    %14 = math.exp %13 : vector<1x32xf32>
    %cst_9 = arith.constant 1.000000e+00 : f32
    %15 = vector.broadcast %cst_9 : f32 to vector<1x32xf32>
    %16 = arith.addf %15, %14 : vector<1x32xf32>
    %17 = arith.divf %15, %16 : vector<1x32xf32>
    %18 = arith.mulf %12, %17 : vector<1x32xf32>
    %c0_10 = arith.constant 0 : index
    %c0_11 = arith.constant 0 : index
    %19 = vector.load %arg4[%c0_10, %c0_11] : memref<32x32xf32, #tpu.memory_space<vmem>>, vector<32x32xf32>
    %cst_12 = arith.constant dense<0.000000e+00> : vector<1x32xf32>
    %20 = tpu.matmul %18, %19, %cst_12 {dimension_numbers = #tpu.dot_dimension_numbers<[1], [0], [0], [1], [0, 0, 1, 1], [], []>} : vector<1x32xf32>, vector<32x32xf32>, vector<1x32xf32> -> vector<1x32xf32>
    %21 = arith.addf %20, %1 : vector<1x32xf32>
    %22 = vector.shape_cast %10 : vector<8x32xf32> to vector<1x8x32xf32>
    %23 = vector.shape_cast %21 : vector<1x32xf32> to vector<1x1x32xf32>
    %24 = vector.broadcast %23 : vector<1x1x32xf32> to vector<1x8x32xf32>
    %25 = arith.addf %22, %24 : vector<1x8x32xf32>
    %cst_13 = arith.constant dense<0.000000e+00> : vector<1x8xf32>
    %26 = vector.multi_reduction <add>, %25, %cst_13 [2] : vector<1x8x32xf32> to vector<1x8xf32>
    %27 = vector.shape_cast %26 : vector<1x8xf32> to vector<1x8x1xf32>
    %28 = arith.mulf %25, %25 : vector<1x8x32xf32>
    %cst_14 = arith.constant dense<0.000000e+00> : vector<1x8xf32>
    %29 = vector.multi_reduction <add>, %28, %cst_14 [2] : vector<1x8x32xf32> to vector<1x8xf32>
    %30 = vector.shape_cast %29 : vector<1x8xf32> to vector<1x8x1xf32>
    %cst_15 = arith.constant 3.125000e-02 : f32
    %31 = vector.broadcast %cst_15 : f32 to vector<1x8x1xf32>
    %32 = arith.mulf %27, %31 : vector<1x8x1xf32>
    %cst_16 = arith.constant 3.125000e-02 : f32
    %33 = vector.broadcast %cst_16 : f32 to vector<1x8x1xf32>
    %34 = arith.mulf %30, %33 : vector<1x8x1xf32>
    %35 = arith.mulf %32, %32 : vector<1x8x1xf32>
    %36 = arith.subf %34, %35 : vector<1x8x1xf32>
    %cst_17 = arith.constant 0.000000e+00 : f32
    %37 = vector.broadcast %cst_17 : f32 to vector<1x8x1xf32>
    %38 = arith.maximumf %36, %37 : vector<1x8x1xf32>
    %39 = vector.broadcast %32 : vector<1x8x1xf32> to vector<1x8x32xf32>
    %40 = arith.subf %25, %39 : vector<1x8x32xf32>
    %cst_18 = arith.constant 9.99999974E-6 : f32
    %41 = vector.broadcast %cst_18 : f32 to vector<1x8x1xf32>
    %42 = arith.addf %38, %41 : vector<1x8x1xf32>
    %43 = math.rsqrt %42 : vector<1x8x1xf32>
    %44 = vector.broadcast %43 : vector<1x8x1xf32> to vector<1x8x32xf32>
    %45 = arith.mulf %40, %44 : vector<1x8x32xf32>
    %46 = vector.shape_cast %2 : vector<1x32xf32> to vector<1x1x32xf32>
    %47 = vector.broadcast %46 : vector<1x1x32xf32> to vector<1x8x32xf32>
    %48 = arith.mulf %45, %47 : vector<1x8x32xf32>
    %49 = vector.shape_cast %3 : vector<1x32xf32> to vector<1x1x32xf32>
    %50 = vector.broadcast %49 : vector<1x1x32xf32> to vector<1x8x32xf32>
    %51 = arith.addf %48, %50 : vector<1x8x32xf32>
    %52 = vector.extract_strided_slice %51 {offsets = [0, 0, 0], sizes = [1, 1, 32], strides = [1, 1, 1]} : vector<1x8x32xf32> to vector<1x1x32xf32>
    %c0_19 = arith.constant 0 : index
    %c0_20 = arith.constant 0 : index
    %c0_21 = arith.constant 0 : index
    %53 = vector.load %arg6[%c0_19, %c0_20, %c0_21] : memref<8x8x1xf32, #tpu.memory_space<vmem>>, vector<1x8x1xf32>
    %54 = vector.shape_cast %53 : vector<1x8x1xf32> to vector<8x1xf32>
    %55 = vector.shape_cast %54 : vector<8x1xf32> to vector<1x8x1xf32>
    %56 = vector.broadcast %52 : vector<1x1x32xf32> to vector<1x8x32xf32>
    %57 = vector.broadcast %55 : vector<1x8x1xf32> to vector<1x8x32xf32>
    %58 = arith.mulf %56, %57 : vector<1x8x32xf32>
    %c0_22 = arith.constant 0 : index
    %c0_23 = arith.constant 0 : index
    %59 = vector.load %arg8[%c0_22, %c0_23] : memref<8x1xf32, #tpu.memory_space<vmem>>, vector<8x1xf32>
    %60 = vector.shape_cast %59 : vector<8x1xf32> to vector<1x8x1xf32>
    %61 = vector.broadcast %60 : vector<1x8x1xf32> to vector<1x8x32xf32>
    %62 = arith.addf %58, %61 : vector<1x8x32xf32>
    %63 = vector.extract_strided_slice %51 {offsets = [0, 1, 0], sizes = [1, 1, 32], strides = [1, 1, 1]} : vector<1x8x32xf32> to vector<1x1x32xf32>
    %c1 = arith.constant 1 : index
    %c0_24 = arith.constant 0 : index
    %c0_25 = arith.constant 0 : index
    %64 = vector.load %arg6[%c1, %c0_24, %c0_25] : memref<8x8x1xf32, #tpu.memory_space<vmem>>, vector<1x8x1xf32>
    %65 = vector.shape_cast %64 : vector<1x8x1xf32> to vector<8x1xf32>
    %66 = vector.shape_cast %65 : vector<8x1xf32> to vector<1x8x1xf32>
    %67 = vector.broadcast %63 : vector<1x1x32xf32> to vector<1x8x32xf32>
    %68 = vector.broadcast %66 : vector<1x8x1xf32> to vector<1x8x32xf32>
    %69 = arith.mulf %67, %68 : vector<1x8x32xf32>
    %70 = arith.addf %62, %69 : vector<1x8x32xf32>
    %71 = vector.extract_strided_slice %51 {offsets = [0, 2, 0], sizes = [1, 1, 32], strides = [1, 1, 1]} : vector<1x8x32xf32> to vector<1x1x32xf32>
    %c2 = arith.constant 2 : index
    %c0_26 = arith.constant 0 : index
    %c0_27 = arith.constant 0 : index
    %72 = vector.load %arg6[%c2, %c0_26, %c0_27] : memref<8x8x1xf32, #tpu.memory_space<vmem>>, vector<1x8x1xf32>
    %73 = vector.shape_cast %72 : vector<1x8x1xf32> to vector<8x1xf32>
    %74 = vector.shape_cast %73 : vector<8x1xf32> to vector<1x8x1xf32>
    %75 = vector.broadcast %71 : vector<1x1x32xf32> to vector<1x8x32xf32>
    %76 = vector.broadcast %74 : vector<1x8x1xf32> to vector<1x8x32xf32>
    %77 = arith.mulf %75, %76 : vector<1x8x32xf32>
    %78 = arith.addf %70, %77 : vector<1x8x32xf32>
    %79 = vector.extract_strided_slice %51 {offsets = [0, 3, 0], sizes = [1, 1, 32], strides = [1, 1, 1]} : vector<1x8x32xf32> to vector<1x1x32xf32>
    %c3 = arith.constant 3 : index
    %c0_28 = arith.constant 0 : index
    %c0_29 = arith.constant 0 : index
    %80 = vector.load %arg6[%c3, %c0_28, %c0_29] : memref<8x8x1xf32, #tpu.memory_space<vmem>>, vector<1x8x1xf32>
    %81 = vector.shape_cast %80 : vector<1x8x1xf32> to vector<8x1xf32>
    %82 = vector.shape_cast %81 : vector<8x1xf32> to vector<1x8x1xf32>
    %83 = vector.broadcast %79 : vector<1x1x32xf32> to vector<1x8x32xf32>
    %84 = vector.broadcast %82 : vector<1x8x1xf32> to vector<1x8x32xf32>
    %85 = arith.mulf %83, %84 : vector<1x8x32xf32>
    %86 = arith.addf %78, %85 : vector<1x8x32xf32>
    %87 = vector.extract_strided_slice %51 {offsets = [0, 4, 0], sizes = [1, 1, 32], strides = [1, 1, 1]} : vector<1x8x32xf32> to vector<1x1x32xf32>
    %c4 = arith.constant 4 : index
    %c0_30 = arith.constant 0 : index
    %c0_31 = arith.constant 0 : index
    %88 = vector.load %arg6[%c4, %c0_30, %c0_31] : memref<8x8x1xf32, #tpu.memory_space<vmem>>, vector<1x8x1xf32>
    %89 = vector.shape_cast %88 : vector<1x8x1xf32> to vector<8x1xf32>
    %90 = vector.shape_cast %89 : vector<8x1xf32> to vector<1x8x1xf32>
    %91 = vector.broadcast %87 : vector<1x1x32xf32> to vector<1x8x32xf32>
    %92 = vector.broadcast %90 : vector<1x8x1xf32> to vector<1x8x32xf32>
    %93 = arith.mulf %91, %92 : vector<1x8x32xf32>
    %94 = arith.addf %86, %93 : vector<1x8x32xf32>
    %95 = vector.extract_strided_slice %51 {offsets = [0, 5, 0], sizes = [1, 1, 32], strides = [1, 1, 1]} : vector<1x8x32xf32> to vector<1x1x32xf32>
    %c5 = arith.constant 5 : index
    %c0_32 = arith.constant 0 : index
    %c0_33 = arith.constant 0 : index
    %96 = vector.load %arg6[%c5, %c0_32, %c0_33] : memref<8x8x1xf32, #tpu.memory_space<vmem>>, vector<1x8x1xf32>
    %97 = vector.shape_cast %96 : vector<1x8x1xf32> to vector<8x1xf32>
    %98 = vector.shape_cast %97 : vector<8x1xf32> to vector<1x8x1xf32>
    %99 = vector.broadcast %95 : vector<1x1x32xf32> to vector<1x8x32xf32>
    %100 = vector.broadcast %98 : vector<1x8x1xf32> to vector<1x8x32xf32>
    %101 = arith.mulf %99, %100 : vector<1x8x32xf32>
    %102 = arith.addf %94, %101 : vector<1x8x32xf32>
    %103 = vector.extract_strided_slice %51 {offsets = [0, 6, 0], sizes = [1, 1, 32], strides = [1, 1, 1]} : vector<1x8x32xf32> to vector<1x1x32xf32>
    %c6 = arith.constant 6 : index
    %c0_34 = arith.constant 0 : index
    %c0_35 = arith.constant 0 : index
    %104 = vector.load %arg6[%c6, %c0_34, %c0_35] : memref<8x8x1xf32, #tpu.memory_space<vmem>>, vector<1x8x1xf32>
    %105 = vector.shape_cast %104 : vector<1x8x1xf32> to vector<8x1xf32>
    %106 = vector.shape_cast %105 : vector<8x1xf32> to vector<1x8x1xf32>
    %107 = vector.broadcast %103 : vector<1x1x32xf32> to vector<1x8x32xf32>
    %108 = vector.broadcast %106 : vector<1x8x1xf32> to vector<1x8x32xf32>
    %109 = arith.mulf %107, %108 : vector<1x8x32xf32>
    %110 = arith.addf %102, %109 : vector<1x8x32xf32>
    %111 = vector.extract_strided_slice %51 {offsets = [0, 7, 0], sizes = [1, 1, 32], strides = [1, 1, 1]} : vector<1x8x32xf32> to vector<1x1x32xf32>
    %c7 = arith.constant 7 : index
    %c0_36 = arith.constant 0 : index
    %c0_37 = arith.constant 0 : index
    %112 = vector.load %arg6[%c7, %c0_36, %c0_37] : memref<8x8x1xf32, #tpu.memory_space<vmem>>, vector<1x8x1xf32>
    %113 = vector.shape_cast %112 : vector<1x8x1xf32> to vector<8x1xf32>
    %114 = vector.shape_cast %113 : vector<8x1xf32> to vector<1x8x1xf32>
    %115 = vector.broadcast %111 : vector<1x1x32xf32> to vector<1x8x32xf32>
    %116 = vector.broadcast %114 : vector<1x8x1xf32> to vector<1x8x32xf32>
    %117 = arith.mulf %115, %116 : vector<1x8x32xf32>
    %118 = arith.addf %110, %117 : vector<1x8x32xf32>
    %119 = arith.negf %118 : vector<1x8x32xf32>
    %120 = math.exp %119 : vector<1x8x32xf32>
    %cst_38 = arith.constant 1.000000e+00 : f32
    %121 = vector.broadcast %cst_38 : f32 to vector<1x8x32xf32>
    %122 = arith.addf %121, %120 : vector<1x8x32xf32>
    %123 = arith.divf %121, %122 : vector<1x8x32xf32>
    %124 = arith.mulf %118, %123 : vector<1x8x32xf32>
    %125 = arith.addf %25, %124 : vector<1x8x32xf32>
    %126 = vector.shape_cast %125 : vector<1x8x32xf32> to vector<8x32xf32>
    %cst_39 = arith.constant dense<0.000000e+00> : vector<8xf32>
    %127 = vector.multi_reduction <add>, %126, %cst_39 [1] : vector<8x32xf32> to vector<8xf32>
    %128 = vector.shape_cast %127 : vector<8xf32> to vector<8x1xf32>
    %129 = arith.mulf %126, %126 : vector<8x32xf32>
    %cst_40 = arith.constant dense<0.000000e+00> : vector<8xf32>
    %130 = vector.multi_reduction <add>, %129, %cst_40 [1] : vector<8x32xf32> to vector<8xf32>
    %131 = vector.shape_cast %130 : vector<8xf32> to vector<8x1xf32>
    %cst_41 = arith.constant 3.125000e-02 : f32
    %132 = vector.broadcast %cst_41 : f32 to vector<8x1xf32>
    %133 = arith.mulf %128, %132 : vector<8x1xf32>
    %cst_42 = arith.constant 3.125000e-02 : f32
    %134 = vector.broadcast %cst_42 : f32 to vector<8x1xf32>
    %135 = arith.mulf %131, %134 : vector<8x1xf32>
    %136 = arith.mulf %133, %133 : vector<8x1xf32>
    %137 = arith.subf %135, %136 : vector<8x1xf32>
    %cst_43 = arith.constant 0.000000e+00 : f32
    %138 = vector.broadcast %cst_43 : f32 to vector<8x1xf32>
    %139 = arith.maximumf %137, %138 : vector<8x1xf32>
    %140 = vector.broadcast %133 : vector<8x1xf32> to vector<8x32xf32>
    %141 = arith.subf %126, %140 : vector<8x32xf32>
    %cst_44 = arith.constant 9.99999974E-6 : f32
    %142 = vector.broadcast %cst_44 : f32 to vector<8x1xf32>
    %143 = arith.addf %139, %142 : vector<8x1xf32>
    %144 = math.rsqrt %143 : vector<8x1xf32>
    %145 = vector.broadcast %144 : vector<8x1xf32> to vector<8x32xf32>
    %146 = arith.mulf %141, %145 : vector<8x32xf32>
    %147 = vector.broadcast %4 : vector<1x32xf32> to vector<8x32xf32>
    %148 = arith.mulf %146, %147 : vector<8x32xf32>
    %149 = vector.broadcast %5 : vector<1x32xf32> to vector<8x32xf32>
    %150 = arith.addf %148, %149 : vector<8x32xf32>
    %c0_45 = arith.constant 0 : index
    %c0_46 = arith.constant 0 : index
    %151 = vector.load %arg5[%c0_45, %c0_46] : memref<32x32xf32, #tpu.memory_space<vmem>>, vector<32x32xf32>
    %cst_47 = arith.constant dense<0.000000e+00> : vector<8x32xf32>
    %152 = tpu.matmul %150, %151, %cst_47 {dimension_numbers = #tpu.dot_dimension_numbers<[1], [0], [0], [1], [0, 0, 1, 1], [], []>} : vector<8x32xf32>, vector<32x32xf32>, vector<8x32xf32> -> vector<8x32xf32>
    %153 = vector.broadcast %6 : vector<1x32xf32> to vector<8x32xf32>
    %154 = arith.addf %152, %153 : vector<8x32xf32>
    %155 = arith.negf %154 : vector<8x32xf32>
    %156 = math.exp %155 : vector<8x32xf32>
    %cst_48 = arith.constant 1.000000e+00 : f32
    %157 = vector.broadcast %cst_48 : f32 to vector<8x32xf32>
    %158 = arith.addf %157, %156 : vector<8x32xf32>
    %159 = arith.divf %157, %158 : vector<8x32xf32>
    %160 = arith.mulf %154, %159 : vector<8x32xf32>
    %161 = vector.shape_cast %160 : vector<8x32xf32> to vector<1x8x32xf32>
    %162 = arith.addf %125, %161 : vector<1x8x32xf32>
    %c0_49 = arith.constant 0 : index
    %c0_50 = arith.constant 0 : index
    %c0_51 = arith.constant 0 : index
    %163 = vector.load %arg9[%c0_49, %c0_50, %c0_51] : memref<1x8x32xf32, #tpu.memory_space<vmem>>, vector<1x8x32xf32>
    tpu.vector_store %arg9[%c0_49, %c0_50, %c0_51], %162 {strides = array<i32>} : memref<1x8x32xf32, #tpu.memory_space<vmem>>, vector<1x8x32xf32>,
    return
  }
  func.func @transform_0(%arg0: i32) -> (i32, i32, i32) {
    %c0_i32 = arith.constant 0 : i32
    %c0_i32_0 = arith.constant 0 : i32
    %c0_i32_1 = arith.constant 0 : i32
    return %arg0, %c0_i32, %c0_i32_0 : i32, i32, i32
  }
  func.func @transform_1(%arg0: i32) -> (i32, i32, i32) {
    %c0_i32 = arith.constant 0 : i32
    %c0_i32_0 = arith.constant 0 : i32
    %c0_i32_1 = arith.constant 0 : i32
    return %arg0, %c0_i32, %c0_i32_0 : i32, i32, i32
  }
  func.func @transform_2(%arg0: i32) -> (i32, i32) {
    %c0_i32 = arith.constant 0 : i32
    %c0_i32_0 = arith.constant 0 : i32
    %c0_i32_1 = arith.constant 0 : i32
    return %c0_i32, %c0_i32_0 : i32, i32
  }
  func.func @transform_3(%arg0: i32) -> (i32, i32) {
    %c0_i32 = arith.constant 0 : i32
    %c0_i32_0 = arith.constant 0 : i32
    %c0_i32_1 = arith.constant 0 : i32
    return %c0_i32, %c0_i32_0 : i32, i32
  }
  func.func @transform_4(%arg0: i32) -> (i32, i32) {
    %c0_i32 = arith.constant 0 : i32
    %c0_i32_0 = arith.constant 0 : i32
    %c0_i32_1 = arith.constant 0 : i32
    return %c0_i32, %c0_i32_0 : i32, i32
  }
  func.func @transform_5(%arg0: i32) -> (i32, i32, i32) {
    %c0_i32 = arith.constant 0 : i32
    %c0_i32_0 = arith.constant 0 : i32
    %c0_i32_1 = arith.constant 0 : i32
    %c0_i32_2 = arith.constant 0 : i32
    return %c0_i32, %c0_i32_0, %c0_i32_1 : i32, i32, i32
  }
  func.func @transform_6(%arg0: i32) -> (i32, i32) {
    %c0_i32 = arith.constant 0 : i32
    %c0_i32_0 = arith.constant 0 : i32
    %c0_i32_1 = arith.constant 0 : i32
    return %c0_i32, %c0_i32_0 : i32, i32
  }
  func.func @transform_7(%arg0: i32) -> (i32, i32) {
    %c0_i32 = arith.constant 0 : i32
    %c0_i32_0 = arith.constant 0 : i32
    %c0_i32_1 = arith.constant 0 : i32
    return %c0_i32, %c0_i32_0 : i32, i32
  }
  func.func @transform_8(%arg0: i32) -> (i32, i32, i32) {
    %c0_i32 = arith.constant 0 : i32
    %c0_i32_0 = arith.constant 0 : i32
    %c0_i32_1 = arith.constant 0 : i32
    return %arg0, %c0_i32, %c0_i32_0 : i32, i32, i32
  }
}

</mosaic_0001>

<llo_original>
// kernel: tpu_custom_call.1
$region0: #{tpu_custom_call.1}
  #allocation0 [shape = 'u32[]', space=smem, size = 0x4, offset = 0x4, fixed_abs, tag = 'smem constant byte address 0x4 - core index']
  #allocation1 [shape = 'u32[72,128]{1,0:T(1,128)}', space=vmem, size = 0x9000, scoped, tag = 'internal scratch']
  %s0 = inlined_call_operand.vmem [shape: f32[2,8,320], index: 0, kind: input, shape index: {}]
  %s1 = inlined_call_operand.vmem [shape: f32[2,1,32], index: 1, kind: input, shape index: {}]
  %s2 = inlined_call_operand.vmem [shape: f32[320,32], index: 2, kind: input, shape index: {}]
  %s3 = inlined_call_operand.vmem [shape: f32[32,32], index: 3, kind: input, shape index: {}]
  %s4 = inlined_call_operand.vmem [shape: f32[32,32], index: 4, kind: input, shape index: {}]
  %s5 = inlined_call_operand.vmem [shape: f32[8,8,1], index: 5, kind: input, shape index: {}]
  %s6 = inlined_call_operand.vmem [shape: f32[6,32], index: 6, kind: input, shape index: {}]
  %s7 = inlined_call_operand.vmem [shape: f32[8,1], index: 7, kind: input, shape index: {}]
  %s8 = inlined_call_operand.hbm [shape: f32[2,8,32], index: 8, kind: output, shape index: {}]
  %s9 = sld [smem:[#allocation0]]
  $region65: #{tpu_custom_call.1} parent=0
    _
  %s11 = ssub.s32 1, %s9
  %s12 = scalar_select 0, %s11, %s9
  $region1: #{tpu_custom_call.1} parent=0
    #allocation2 [shape = 'u8[8192]{0}', space=vmem, size = 0x2000, scoped, tag = 'output window, operand 0']
    #allocation3 [shape = 's32[2]{0}', space=sflag, size = 0x8, scoped, tag = 'scoped memory for tpu_custom_call.1']
    %13 = vsyncpa [#allocation3], 0
    %s14 = scalar_lea.sflag [#allocation3], 1
    %15 = vsyncpa %s14, 0
    loop: start=0, step=1, limit=4
    $region2: #{tpu_custom_call.1} parent=1 // loop_pre_header
      _
    $region3: #{tpu_custom_call.1} parent=1 // loop_header
      %s17 = sphi 0, %s21
      %p18 = scmp.ge.s32.totalorder %s17, 4
      %s27 = sphi 0, %s29
      %s30 = sphi 0, %s27
      %s31 = sphi 0, %s30
      %s47 = sphi 0, %s31
      %s53 = sphi 0, %s55
      %s56 = sphi 0, %s53
      %s57 = sphi 0, %s56
      %s73 = sphi 0, %s57
      %s77 = sphi 0, %s77
      %s79 = sphi 0, %s77
      %s80 = sphi 0, %s79
      %s94 = sphi 0, %s80
      %s98 = sphi 0, %s98
      %s100 = sphi 0, %s98
      %s101 = sphi 0, %s100
      %s115 = sphi 0, %s101
      %s119 = sphi 0, %s119
      %s121 = sphi 0, %s119
      %s122 = sphi 0, %s121
      %s136 = sphi 0, %s122
      %s140 = sphi 0, %s140
      %s142 = sphi 0, %s140
      %s143 = sphi 0, %s142
      %s157 = sphi 0, %s143
      %s161 = sphi 0, %s161
      %s163 = sphi 0, %s161
      %s164 = sphi 0, %s163
      %s178 = sphi 0, %s164
      %s182 = sphi 0, %s182
      %s184 = sphi 0, %s182
      %s185 = sphi 0, %s184
      %s199 = sphi 0, %s185
      %s205 = sphi 0, %s207
      %s208 = sphi 0, %s205
      %s209 = sphi 0, %s208
      %s225 = sphi 0, %s209
    $region4: #{tpu_custom_call.1} parent=1 // loop_header_branch
      %20 = sbr.rel (%p18) target = $region8
    $region5: #{tpu_custom_call.1} parent=1 // loop_body
      %s22 = ssub.s32 %s17, 1
      %s23 = ssub.s32 %s17, 2
      %s24 = sadd.s32 %s17, 1
      %s25 = ssub.s32 %s17, %s24
      %p26 = scmp.eq.s32.totalorder %s25, 0
      %s28 = sadd.s32 %s27, 1
      %s29 = scalar_select %p26, %s27, %s28
      %p32 = pneg %p26
      %p33 = scmp.eq.s32.totalorder %s17, 1
      %p34 = por %p32, %p33
      %p35 = scmp.ne.s32.totalorder %s27, %s30
      %p36 = scmp.eq.s32.totalorder %s17, 0
      %p37 = por %p35, %p36
      %p38 = scmp.ne.s32.totalorder %s27, %s30
      %p39 = scmp.eq.s32.totalorder %s22, 1
      %p40 = por %p38, %p39
      %p41 = scmp.ne.s32.totalorder %s30, %s31
      %p42 = scmp.eq.s32.totalorder %s22, 0
      %p43 = por %p41, %p42
      %p44 = scmp.ne.s32.totalorder %s30, %s31
      %p45 = scmp.eq.s32.totalorder %s23, 1
      %p46 = por %p44, %p45
      %p48 = scmp.ne.s32.totalorder %s31, %s47
      %p49 = scmp.eq.s32.totalorder %s23, 0
      %p50 = por %p48, %p49
      %s51 = ssub.s32 %s17, %s24
      %p52 = scmp.eq.s32.totalorder %s51, 0
      %s54 = sadd.s32 %s53, 1
      %s55 = scalar_select %p52, %s53, %s54
      %p58 = pneg %p52
      %p59 = scmp.eq.s32.totalorder %s17, 1
      %p60 = por %p58, %p59
      %p61 = scmp.ne.s32.totalorder %s53, %s56
      %p62 = scmp.eq.s32.totalorder %s17, 0
      %p63 = por %p61, %p62
      %p64 = scmp.ne.s32.totalorder %s53, %s56
      %p65 = scmp.eq.s32.totalorder %s22, 1
      %p66 = por %p64, %p65
      %p67 = scmp.ne.s32.totalorder %s56, %s57
      %p68 = scmp.eq.s32.totalorder %s22, 0
      %p69 = por %p67, %p68
      %p70 = scmp.ne.s32.totalorder %s56, %s57
      %p71 = scmp.eq.s32.totalorder %s23, 1
      %p72 = por %p70, %p71
      %p74 = scmp.ne.s32.totalorder %s57, %s73
      %p75 = scmp.eq.s32.totalorder %s23, 0
      %p76 = por %p74, %p75
      %s78 = sadd.s32 %s77, 1
      %p81 = scmp.eq.s32.totalorder %s17, 1
      %p82 = scmp.ne.s32.totalorder %s77, %s79
      %p83 = scmp.eq.s32.totalorder %s17, 0
      %p84 = por %p82, %p83
      %p85 = scmp.ne.s32.totalorder %s77, %s79
      %p86 = scmp.eq.s32.totalorder %s22, 1
      %p87 = por %p85, %p86
      %p88 = scmp.ne.s32.totalorder %s79, %s80
      %p89 = scmp.eq.s32.totalorder %s22, 0
      %p90 = por %p88, %p89
      %p91 = scmp.ne.s32.totalorder %s79, %s80
      %p92 = scmp.eq.s32.totalorder %s23, 1
      %p93 = por %p91, %p92
      %p95 = scmp.ne.s32.totalorder %s80, %s94
      %p96 = scmp.eq.s32.totalorder %s23, 0
      %p97 = por %p95, %p96
      %s99 = sadd.s32 %s98, 1
      %p102 = scmp.eq.s32.totalorder %s17, 1
      %p103 = scmp.ne.s32.totalorder %s98, %s100
      %p104 = scmp.eq.s32.totalorder %s17, 0
      %p105 = por %p103, %p104
      %p106 = scmp.ne.s32.totalorder %s98, %s100
      %p107 = scmp.eq.s32.totalorder %s22, 1
      %p108 = por %p106, %p107
      %p109 = scmp.ne.s32.totalorder %s100, %s101
      %p110 = scmp.eq.s32.totalorder %s22, 0
      %p111 = por %p109, %p110
      %p112 = scmp.ne.s32.totalorder %s100, %s101
      %p113 = scmp.eq.s32.totalorder %s23, 1
      %p114 = por %p112, %p113
      %p116 = scmp.ne.s32.totalorder %s101, %s115
      %p117 = scmp.eq.s32.totalorder %s23, 0
      %p118 = por %p116, %p117
      %s120 = sadd.s32 %s119, 1
      %p123 = scmp.eq.s32.totalorder %s17, 1
      %p124 = scmp.ne.s32.totalorder %s119, %s121
      %p125 = scmp.eq.s32.totalorder %s17, 0
      %p126 = por %p124, %p125
      %p127 = scmp.ne.s32.totalorder %s119, %s121
      %p128 = scmp.eq.s32.totalorder %s22, 1
      %p129 = por %p127, %p128
      %p130 = scmp.ne.s32.totalorder %s121, %s122
      %p131 = scmp.eq.s32.totalorder %s22, 0
      %p132 = por %p130, %p131
      %p133 = scmp.ne.s32.totalorder %s121, %s122
      %p134 = scmp.eq.s32.totalorder %s23, 1
      %p135 = por %p133, %p134
      %p137 = scmp.ne.s32.totalorder %s122, %s136
      %p138 = scmp.eq.s32.totalorder %s23, 0
      %p139 = por %p137, %p138
      %s141 = sadd.s32 %s140, 1
      %p144 = scmp.eq.s32.totalorder %s17, 1
      %p145 = scmp.ne.s32.totalorder %s140, %s142
      %p146 = scmp.eq.s32.totalorder %s17, 0
      %p147 = por %p145, %p146
      %p148 = scmp.ne.s32.totalorder %s140, %s142
      %p149 = scmp.eq.s32.totalorder %s22, 1
      %p150 = por %p148, %p149
      %p151 = scmp.ne.s32.totalorder %s142, %s143
      %p152 = scmp.eq.s32.totalorder %s22, 0
      %p153 = por %p151, %p152
      %p154 = scmp.ne.s32.totalorder %s142, %s143
      %p155 = scmp.eq.s32.totalorder %s23, 1
      %p156 = por %p154, %p155
      %p158 = scmp.ne.s32.totalorder %s143, %s157
      %p159 = scmp.eq.s32.totalorder %s23, 0
      %p160 = por %p158, %p159
      %s162 = sadd.s32 %s161, 1
      %p165 = scmp.eq.s32.totalorder %s17, 1
      %p166 = scmp.ne.s32.totalorder %s161, %s163
      %p167 = scmp.eq.s32.totalorder %s17, 0
      %p168 = por %p166, %p167
      %p169 = scmp.ne.s32.totalorder %s161, %s163
      %p170 = scmp.eq.s32.totalorder %s22, 1
      %p171 = por %p169, %p170
      %p172 = scmp.ne.s32.totalorder %s163, %s164
      %p173 = scmp.eq.s32.totalorder %s22, 0
      %p174 = por %p172, %p173
      %p175 = scmp.ne.s32.totalorder %s163, %s164
      %p176 = scmp.eq.s32.totalorder %s23, 1
      %p177 = por %p175, %p176
      %p179 = scmp.ne.s32.totalorder %s164, %s178
      %p180 = scmp.eq.s32.totalorder %s23, 0
      %p181 = por %p179, %p180
      %s183 = sadd.s32 %s182, 1
      %p186 = scmp.eq.s32.totalorder %s17, 1
      %p187 = scmp.ne.s32.totalorder %s182, %s184
      %p188 = scmp.eq.s32.totalorder %s17, 0
      %p189 = por %p187, %p188
      %p190 = scmp.ne.s32.totalorder %s182, %s184
      %p191 = scmp.eq.s32.totalorder %s22, 1
      %p192 = por %p190, %p191
      %p193 = scmp.ne.s32.totalorder %s184, %s185
      %p194 = scmp.eq.s32.totalorder %s22, 0
      %p195 = por %p193, %p194
      %p196 = scmp.ne.s32.totalorder %s184, %s185
      %p197 = scmp.eq.s32.totalorder %s23, 1
      %p198 = por %p196, %p197
      %p200 = scmp.ne.s32.totalorder %s185, %s199
      %p201 = scmp.eq.s32.totalorder %s23, 0
      %p202 = por %p200, %p201
      %s203 = ssub.s32 %s17, %s24
      %p204 = scmp.eq.s32.totalorder %s203, 0
      %s206 = sadd.s32 %s205, 1
      %s207 = scalar_select %p204, %s205, %s206
      %p210 = pneg %p204
      %p211 = scmp.eq.s32.totalorder %s17, 1
      %p212 = por %p210, %p211
      %p213 = scmp.ne.s32.totalorder %s205, %s208
      %p214 = scmp.eq.s32.totalorder %s17, 0
      %p215 = por %p213, %p214
      %p216 = scmp.ne.s32.totalorder %s205, %s208
      %p217 = scmp.eq.s32.totalorder %s22, 1
      %p218 = por %p216, %p217
      %p219 = scmp.ne.s32.totalorder %s208, %s209
      %p220 = scmp.eq.s32.totalorder %s22, 0
      %p221 = por %p219, %p220
      %p222 = scmp.ne.s32.totalorder %s208, %s209
      %p223 = scmp.eq.s32.totalorder %s23, 1
      %p224 = por %p222, %p223
      %p226 = scmp.ne.s32.totalorder %s209, %s225
      %p227 = scmp.eq.s32.totalorder %s23, 0
      %p228 = por %p226, %p227
      %p229 = scmp.le.s32.totalorder 1, %s17
      %p230 = scmp.lt.s32.totalorder %s17, 3
      %p231 = pnand %p229, %p230
      %p232 = pneg %p231
      // Predicated region
      $region9: #{tpu_custom_call.1} parent=5 // pred_check
        _
      $region10: #{tpu_custom_call.1} parent=5 // pred_check_branch
        %234 = sbr.rel (%p231) target = $region12
      $region11: #{tpu_custom_call.1} parent=5 // pred_region
        %s235 = ssub.s32 %s17, 1
        // Predicated region
        $region13: #{tpu_custom_call.1} parent=11 // pred_check
          %p236 = pneg %p90
        $region14: #{tpu_custom_call.1} parent=11 // pred_check_branch
          %238 = sbr.rel (%p236) target = $region16
        $region15: #{tpu_custom_call.1} parent=11 // pred_region
          _
        $region16: #{tpu_custom_call.1} parent=11 // pred_fallthru
          _
        // Predicated region
        $region17: #{tpu_custom_call.1} parent=11 // pred_check
          %p239 = pneg %p111
        $region18: #{tpu_custom_call.1} parent=11 // pred_check_branch
          %241 = sbr.rel (%p239) target = $region20
        $region19: #{tpu_custom_call.1} parent=11 // pred_region
          _
        $region20: #{tpu_custom_call.1} parent=11 // pred_fallthru
          _
        // Predicated region
        $region21: #{tpu_custom_call.1} parent=11 // pred_check
          %p242 = pneg %p132
        $region22: #{tpu_custom_call.1} parent=11 // pred_check_branch
          %244 = sbr.rel (%p242) target = $region24
        $region23: #{tpu_custom_call.1} parent=11 // pred_region
          _
        $region24: #{tpu_custom_call.1} parent=11 // pred_fallthru
          _
        // Predicated region
        $region25: #{tpu_custom_call.1} parent=11 // pred_check
          %p245 = pneg %p153
        $region26: #{tpu_custom_call.1} parent=11 // pred_check_branch
          %247 = sbr.rel (%p245) target = $region28
        $region27: #{tpu_custom_call.1} parent=11 // pred_region
          _
        $region28: #{tpu_custom_call.1} parent=11 // pred_fallthru
          _
        // Predicated region
        $region29: #{tpu_custom_call.1} parent=11 // pred_check
          %p248 = pneg %p174
        $region30: #{tpu_custom_call.1} parent=11 // pred_check_branch
          %250 = sbr.rel (%p248) target = $region32
        $region31: #{tpu_custom_call.1} parent=11 // pred_region
          _
        $region32: #{tpu_custom_call.1} parent=11 // pred_fallthru
          _
        // Predicated region
        $region33: #{tpu_custom_call.1} parent=11 // pred_check
          %p251 = pneg %p195
        $region34: #{tpu_custom_call.1} parent=11 // pred_check_branch
          %253 = sbr.rel (%p251) target = $region36
        $region35: #{tpu_custom_call.1} parent=11 // pred_region
          _
        $region36: #{tpu_custom_call.1} parent=11 // pred_fallthru
          _
      $region12: #{tpu_custom_call.1} parent=5 // pred_fallthru
        _
      %p254 = scmp.lt.s32.totalorder %s17, 2
      // Predicated region
      $region37: #{tpu_custom_call.1} parent=5 // pred_check
        %p255 = pneg %p254
      $region38: #{tpu_custom_call.1} parent=5 // pred_check_branch
        %257 = sbr.rel (%p255) target = $region40
      $region39: #{tpu_custom_call.1} parent=5 // pred_region
        // Predicated region
        $region41: #{tpu_custom_call.1} parent=39 // pred_check
          %p258 = pneg %p37
        $region42: #{tpu_custom_call.1} parent=39 // pred_check_branch
          %260 = sbr.rel (%p258) target = $region44
        $region43: #{tpu_custom_call.1} parent=39 // pred_region
          %p261 = scmp.lt.s32.totalorder %s17, 1
          %s262 = scalar_select %p261, %s17, 1
          %s263 = smul.addr %s262, 3
          %s264 = smul.addr %s263, 8
          %s265 = scalar_lea.vmem %s0, %s264
        $region44: #{tpu_custom_call.1} parent=39 // pred_fallthru
          _
        // Predicated region
        $region45: #{tpu_custom_call.1} parent=39 // pred_check
          %p266 = pneg %p63
        $region46: #{tpu_custom_call.1} parent=39 // pred_check_branch
          %268 = sbr.rel (%p266) target = $region48
        $region47: #{tpu_custom_call.1} parent=39 // pred_region
          %p269 = scmp.lt.s32.totalorder %s17, 1
          %s270 = scalar_select %p269, %s17, 1
          %s271 = scalar_lea.vmem %s1, %s270
        $region48: #{tpu_custom_call.1} parent=39 // pred_fallthru
          _
      $region40: #{tpu_custom_call.1} parent=5 // pred_fallthru
        _
      %p272 = scmp.le.s32.totalorder 1, %s17
      %p273 = scmp.lt.s32.totalorder %s17, 3
      %p274 = pnand %p272, %p273
      %p275 = pneg %p274
      // Predicated region
      $region49: #{tpu_custom_call.1} parent=5 // pred_check
        _
      $region50: #{tpu_custom_call.1} parent=5 // pred_check_branch
        %277 = sbr.rel (%p274) target = $region52
      $region51: #{tpu_custom_call.1} parent=5 // pred_region
        %s278 = ssub.s32 %s17, 1
        %p279 = scmp.lt.s32.totalorder %s22, 1
        %s280 = scalar_select %p279, %s22, 1
        %s281 = smul.addr %s280, 3
        %s282 = smul.addr %s281, 8
        %s283 = scalar_lea.vmem %s0, %s282
        %p284 = pneg %p43
        %p285 = pneg %p40
        %p286 = scmp.lt.s32.totalorder %s22, 1
        %s287 = scalar_select %p286, %s22, 1
        %s288 = scalar_lea.vmem %s1, %s287
        %p289 = pneg %p69
        %p290 = pneg %p66
        %p291 = pneg %p90
        %p292 = pneg %p87
        %p293 = pneg %p111
        %p294 = pneg %p108
        %p295 = pneg %p132
        %p296 = pneg %p129
        %p297 = pneg %p153
        %p298 = pneg %p150
        %p299 = pneg %p174
        %p300 = pneg %p171
        %p301 = pneg %p195
        %p302 = pneg %p192
        %p303 = pneg %p221
        %p304 = pneg %p218
        %s305 = sand.u32 %s208, 1
        %s306 = scalar_lea.sflag [#allocation3], %s305
        %s307 = sand.u32 %s208, 1
        %s308 = smul.addr %s307, 8
        %s309 = scalar_lea.vmem [#allocation2], %s308
        %p310 = scmp.lt.s32.totalorder %s22, 1
        %s311 = scalar_select %p310, %s22, 1
        %s312 = smul.addr %s311, 3
        %s313 = smul.addr %s312, 8
        %s314 = scalar_lea.vmem %s0, %s313
        %p315 = scmp.lt.s32.totalorder %s22, 1
        %s316 = scalar_select %p315, %s22, 1
        %s317 = scalar_lea.vmem %s1, %s316
        %v318 = vld [vmem:[%s6] sm:$0x3f]
        %v319 = vld [vmem:[%s314] sm:$0xff]
        %v320 = vld [vmem:[%s314 + $0x8] sm:$0xff]
        %v321 = vld [vmem:[%s314 + $0x10] sm:$0xff]
        %v322 = vld [vmem:[%s2] sm:$0xff]
        %v323 = vld [vmem:[%s2 + $0x8] sm:$0xff]
        %v324 = vld [vmem:[%s2 + $0x10] sm:$0xff]
        %v325 = vld [vmem:[%s2 + $0x18] sm:$0xff]
        %v326 = vld [vmem:[%s2 + $0x20] sm:$0xff]
        %v327 = vld [vmem:[%s2 + $0x28] sm:$0xff]
        %v328 = vld [vmem:[%s2 + $0x30] sm:$0xff]
        %v329 = vld [vmem:[%s2 + $0x38] sm:$0xff]
        %v330 = vld [vmem:[%s2 + $0x40] sm:$0xff]
        %v331 = vld [vmem:[%s2 + $0x48] sm:$0xff]
        %v332 = vld [vmem:[%s2 + $0x50] sm:$0xff]
        %v333 = vld [vmem:[%s2 + $0x58] sm:$0xff]
        %v334 = vld [vmem:[%s2 + $0x60] sm:$0xff]
        %v335 = vld [vmem:[%s2 + $0x68] sm:$0xff]
        %v336 = vld [vmem:[%s2 + $0x70] sm:$0xff]
        %v337 = vld [vmem:[%s2 + $0x78] sm:$0xff]
        %v338 = vld [vmem:[%s2 + $0x80] sm:$0xff]
        %v339 = vld [vmem:[%s2 + $0x88] sm:$0xff]
        %v340 = vld [vmem:[%s2 + $0x90] sm:$0xff]
        %v341 = vld [vmem:[%s2 + $0x98] sm:$0xff]
        %v342 = vld [vmem:[%s2 + $0xa0] sm:$0xff]
        %v343 = vld [vmem:[%s2 + $0xa8] sm:$0xff]
        %v344 = vld [vmem:[%s2 + $0xb0] sm:$0xff]
        %v345 = vld [vmem:[%s2 + $0xb8] sm:$0xff]
        %v346 = vld [vmem:[%s2 + $0xc0] sm:$0xff]
        %v347 = vld [vmem:[%s2 + $0xc8] sm:$0xff]
        %v348 = vld [vmem:[%s2 + $0xd0] sm:$0xff]
        %v349 = vld [vmem:[%s2 + $0xd8] sm:$0xff]
        %v350 = vld [vmem:[%s2 + $0xe0] sm:$0xff]
        %v351 = vld [vmem:[%s2 + $0xe8] sm:$0xff]
        %v352 = vld [vmem:[%s2 + $0xf0] sm:$0xff]
        %v353 = vld [vmem:[%s2 + $0xf8] sm:$0xff]
        %v354 = vld [vmem:[%s2 + $0x100] sm:$0xff]
        %v355 = vld [vmem:[%s2 + $0x108] sm:$0xff]
        %v356 = vld [vmem:[%s2 + $0x110] sm:$0xff]
        %v357 = vld [vmem:[%s2 + $0x118] sm:$0xff]
        %v358 = vld [vmem:[%s2 + $0x120] sm:$0xff]
        %v359 = vld [vmem:[%s2 + $0x128] sm:$0xff]
        %v360 = vld [vmem:[%s2 + $0x130] sm:$0xff]
        %v361 = vld [vmem:[%s2 + $0x138] sm:$0xff]
        %vm362 = vcmask 523264
        %v364 = vsel %vm362, %v321, 0
        %366 = vmatpush.msra.mxu0 %v337
        %367 = vmatpush.msra.mxu0 %v336
        %368 = vmatpush.msra.mxu0 %v335
        %369 = vmatpush.msra.mxu0 %v334
        %370 = vmatpush.msra.mxu0 %v333
        %371 = vmatpush.msra.mxu0 %v332
        %372 = vmatpush.msra.mxu0 %v331
        %373 = vmatpush.msra.mxu0 %v330
        %374 = vmatpush.msra.mxu0 %v329
        %375 = vmatpush.msra.mxu0 %v328
        %376 = vmatpush.msra.mxu0 %v327
        %377 = vmatpush.msra.mxu0 %v326
        %378 = vmatpush.msra.mxu0 %v325
        %379 = vmatpush.msra.mxu0 %v324
        %380 = vmatpush.msra.mxu0 %v323
        %381 = vmatpush.msra.mxu0 %v322
        %382 = vmatmul.f32.gmra.mxu0 %v319
        %v383 = vpop.f32.mrf.mxu0
        %v384 = vadd.f32 0.0, %v383
        %385 = vdwg.mxu0
        %386 = vmatpush.msra.mxu0 %v353
        %387 = vmatpush.msra.mxu0 %v352
        %388 = vmatpush.msra.mxu0 %v351
        %389 = vmatpush.msra.mxu0 %v350
        %390 = vmatpush.msra.mxu0 %v349
        %391 = vmatpush.msra.mxu0 %v348
        %392 = vmatpush.msra.mxu0 %v347
        %393 = vmatpush.msra.mxu0 %v346
        %394 = vmatpush.msra.mxu0 %v345
        %395 = vmatpush.msra.mxu0 %v344
        %396 = vmatpush.msra.mxu0 %v343
        %397 = vmatpush.msra.mxu0 %v342
        %398 = vmatpush.msra.mxu0 %v341
        %399 = vmatpush.msra.mxu0 %v340
        %400 = vmatpush.msra.mxu0 %v339
        %401 = vmatpush.msra.mxu0 %v338
        %402 = vmatmul.f32.gmra.mxu0 %v320
        %v403 = vpop.f32.mrf.mxu0
        %v404 = vadd.f32 %v384, %v403
        %405 = vdwg.mxu0
        %406 = vmatpush.msra.mxu0 0.0
        %407 = vmatpush.msra.mxu0 0.0
        %408 = vmatpush.msra.mxu0 0.0
        %409 = vmatpush.msra.mxu0 0.0
        %410 = vmatpush.msra.mxu0 0.0
        %411 = vmatpush.msra.mxu0 0.0
        %412 = vmatpush.msra.mxu0 0.0
        %413 = vmatpush.msra.mxu0 0.0
        %414 = vmatpush.msra.mxu0 %v361
        %415 = vmatpush.msra.mxu0 %v360
        %416 = vmatpush.msra.mxu0 %v359
        %417 = vmatpush.msra.mxu0 %v358
        %418 = vmatpush.msra.mxu0 %v357
        %419 = vmatpush.msra.mxu0 %v356
        %420 = vmatpush.msra.mxu0 %v355
        %421 = vmatpush.msra.mxu0 %v354
        %422 = vmatmul.f32.gmra.mxu0 %v364
        %v423 = vpop.f32.mrf.mxu0
        %v424 = vadd.f32 %v404, %v423
        %425 = vdwg.mxu0
        %v426 = vld [vmem:[%s317] sm:$0x1]
        %v427 = vxor.u32 %v426, 2147483648
        %v428 = vmul.f32 %v427, 1.442695
        %v429 = vpow.pop %v428
        %v430 = vadd.f32 %v429, 1.0
        %v431 = vrcp.pop %v430
        %v432 = vmul.f32 %v430, %v431
        %v433 = vsub.f32 1.0, %v432
        %v434 = vmul.f32 %v431, %v433
        %v435 = vadd.f32 %v431, %v434
        %vm436 = vweird.f32 %v430
        %vm437 = vweird.f32 %v431
        %vm438 = vmor %vm436, %vm437
        %v439 = vsel %vm438, %v431, %v435
        %v440 = vand.u32 2147483647, %v430
        %vm441 = vcmp.eq.f32.partialorder %v440, 8.507059e+37
        %v442 = vand.u32 %v430, 2147483648
        %v443 = vor.u32 1.1754944e-38, %v442
        %v444 = vsel %vm441, %v443, %v439
        %v445 = vmul.f32 1.0, %v444
        %v446 = vmul.f32 %v426, %v445
        %v447 = vld [vmem:[%s3] sm:$0xff]
        %v448 = vld [vmem:[%s3 + $0x8] sm:$0xff]
        %v449 = vld [vmem:[%s3 + $0x10] sm:$0xff]
        %v450 = vld [vmem:[%s3 + $0x18] sm:$0xff]
        %vm451 = vcmask 261120
        %v453 = vsel %vm451, %v446, 0
        %455 = vmatpush.msra.mxu0 0.0
        %456 = vmatpush.msra.mxu0 0.0
        %457 = vmatpush.msra.mxu0 0.0
        %458 = vmatpush.msra.mxu0 0.0
        %459 = vmatpush.msra.mxu0 0.0
        %460 = vmatpush.msra.mxu0 0.0
        %461 = vmatpush.msra.mxu0 0.0
        %462 = vmatpush.msra.mxu0 0.0
        %463 = vmatpush.msra.mxu0 0.0
        %464 = vmatpush.msra.mxu0 0.0
        %465 = vmatpush.msra.mxu0 0.0
        %466 = vmatpush.msra.mxu0 0.0
        %467 = vmatpush.msra.mxu0 %v450
        %468 = vmatpush.msra.mxu0 %v449
        %469 = vmatpush.msra.mxu0 %v448
        %470 = vmatpush.msra.mxu0 %v447
        %471 = vmatmul.f32.gmra.mxu0 %v453
        %v472 = vpop.f32.mrf.mxu0
        %v473 = vadd.f32 %v318, %v472
        %474 = vdwg.mxu0
        %v475 = vperm.slane %v473, 0
        %v476 = vadd.f32 %v424, %v475
        %v477 = vsel %vm451, %v476, 0.0
        %478 = vadd.xlane.f32.xlu0 %v477
        %v479 = vpop.xlane.xlu0 %478
        %v480 = vmul.f32 %v476, %v476
        %v481 = vsel %vm451, %v480, 0.0
        %482 = vadd.xlane.f32.xlu0 %v481
        %v483 = vpop.xlane.xlu0 %482
        %v484 = vmul.f32 %v479, 0.03125
        %v485 = vmul.f32 %v483, 0.03125
        %v486 = vmul.f32 %v484, %v484
        %v487 = vsub.f32 %v485, %v486
        %v488 = vmax.f32 %v487, 0.0
        %v489 = vsub.f32 %v476, %v484
        %v490 = vadd.f32 %v488, 1e-05
        %v491 = vrsqrt.pop %v490
        %v492 = vmul.f32 %v491, %v490
        %v493 = vmul.f32 %v492, %v491
        %v494 = vmul.f32 0.5, %v493
        %v495 = vsub.f32 1.5, %v494
        %v496 = vmul.f32 %v491, %v495
        %vm497 = vweird.f32 %v490
        %vm498 = vweird.f32 %v491
        %vm499 = vmor %vm497, %vm498
        %v500 = vsel %vm499, %v491, %v496
        %v501 = vmul.f32 %v489, %v500
        %v502 = vperm.slane %v318, 1
        %v503 = vmul.f32 %v501, %v502
        %v504 = vperm.slane %v318, 2
        %v505 = vadd.f32 %v503, %v504
        %v506 = vld [vmem:[%s5] sm:$0xff]
        %v507 = vperm.slane %v505, 0
        %509 = vset.pattern.permute.xlu0 0
        %510 = vperm.xlu0 %509, %v506
        %v511 = vpop.permute.xlu0 %510
        %v513 = vmul.f32 %v507, %v511
        %v514 = vld [vmem:[%s7] sm:$0xff]
        %516 = vset.pattern.permute.xlu0 0
        %517 = vperm.xlu0 %516, %v514
        %v518 = vpop.permute.xlu0 %517
        %v520 = vadd.f32 %v513, %v518
        %s521 = scalar_lea.vmem %s5, 8
        %v522 = vld [vmem:[%s521] sm:$0xff]
        %v523 = vperm.slane %v505, 1
        %525 = vset.pattern.permute.xlu0 0
        %526 = vperm.xlu0 %525, %v522
        %v527 = vpop.permute.xlu0 %526
        %v529 = vmul.f32 %v523, %v527
        %v530 = vadd.f32 %v520, %v529
        %s531 = scalar_lea.vmem %s5, 16
        %v532 = vld [vmem:[%s531] sm:$0xff]
        %v533 = vperm.slane %v505, 2
        %535 = vset.pattern.permute.xlu0 0
        %536 = vperm.xlu0 %535, %v532
        %v537 = vpop.permute.xlu0 %536
        %v539 = vmul.f32 %v533, %v537
        %v540 = vadd.f32 %v530, %v539
        %s541 = scalar_lea.vmem %s5, 24
        %v542 = vld [vmem:[%s541] sm:$0xff]
        %v543 = vperm.slane %v505, 3
        %545 = vset.pattern.permute.xlu0 0
        %546 = vperm.xlu0 %545, %v542
        %v547 = vpop.permute.xlu0 %546
        %v549 = vmul.f32 %v543, %v547
        %v550 = vadd.f32 %v540, %v549
        %s551 = scalar_lea.vmem %s5, 32
        %v552 = vld [vmem:[%s551] sm:$0xff]
        %v553 = vperm.slane %v505, 4
        %555 = vset.pattern.permute.xlu0 0
        %556 = vperm.xlu0 %555, %v552
        %v557 = vpop.permute.xlu0 %556
        %v559 = vmul.f32 %v553, %v557
        %v560 = vadd.f32 %v550, %v559
        %s561 = scalar_lea.vmem %s5, 40
        %v562 = vld [vmem:[%s561] sm:$0xff]
        %v563 = vperm.slane %v505, 5
        %565 = vset.pattern.permute.xlu0 0
        %566 = vperm.xlu0 %565, %v562
        %v567 = vpop.permute.xlu0 %566
        %v569 = vmul.f32 %v563, %v567
        %v570 = vadd.f32 %v560, %v569
        %s571 = scalar_lea.vmem %s5, 48
        %v572 = vld [vmem:[%s571] sm:$0xff]
        %v573 = vperm.slane %v505, 6
        %575 = vset.pattern.permute.xlu0 0
        %576 = vperm.xlu0 %575, %v572
        %v577 = vpop.permute.xlu0 %576
        %v579 = vmul.f32 %v573, %v577
        %v580 = vadd.f32 %v570, %v579
        %s581 = scalar_lea.vmem %s5, 56
        %v582 = vld [vmem:[%s581] sm:$0xff]
        %v583 = vperm.slane %v505, 7
        %585 = vset.pattern.permute.xlu0 0
        %586 = vperm.xlu0 %585, %v582
        %v587 = vpop.permute.xlu0 %586
        %v589 = vmul.f32 %v583, %v587
        %v590 = vadd.f32 %v580, %v589
        %v591 = vxor.u32 %v590, 2147483648
        %v592 = vmul.f32 %v591, 1.442695
        %v593 = vpow.pop %v592
        %v594 = vadd.f32 %v593, 1.0
        %v595 = vrcp.pop %v594
        %v596 = vmul.f32 %v594, %v595
        %v597 = vsub.f32 1.0, %v596
        %v598 = vmul.f32 %v595, %v597
        %v599 = vadd.f32 %v595, %v598
        %vm600 = vweird.f32 %v594
        %vm601 = vweird.f32 %v595
        %vm602 = vmor %vm600, %vm601
        %v603 = vsel %vm602, %v595, %v599
        %v604 = vand.u32 2147483647, %v594
        %vm605 = vcmp.eq.f32.partialorder %v604, 8.507059e+37
        %v606 = vand.u32 %v594, 2147483648
        %v607 = vor.u32 1.1754944e-38, %v606
        %v608 = vsel %vm605, %v607, %v603
        %v609 = vmul.f32 1.0, %v608
        %v610 = vmul.f32 %v590, %v609
        %v611 = vadd.f32 %v476, %v610
        %v612 = vsel %vm451, %v611, 0.0
        %613 = vadd.xlane.f32.xlu0 %v612
        %v614 = vpop.xlane.xlu0 %613
        %v615 = vmul.f32 %v611, %v611
        %v616 = vsel %vm451, %v615, 0.0
        %617 = vadd.xlane.f32.xlu0 %v616
        %v618 = vpop.xlane.xlu0 %617
        %v619 = vmul.f32 %v614, 0.03125
        %v620 = vmul.f32 %v618, 0.03125
        %v621 = vmul.f32 %v619, %v619
        %v622 = vsub.f32 %v620, %v621
        %v623 = vmax.f32 %v622, 0.0
        %v624 = vsub.f32 %v611, %v619
        %v625 = vadd.f32 %v623, 1e-05
        %v626 = vrsqrt.pop %v625
        %v627 = vmul.f32 %v626, %v625
        %v628 = vmul.f32 %v627, %v626
        %v629 = vmul.f32 0.5, %v628
        %v630 = vsub.f32 1.5, %v629
        %v631 = vmul.f32 %v626, %v630
        %vm632 = vweird.f32 %v625
        %vm633 = vweird.f32 %v626
        %vm634 = vmor %vm632, %vm633
        %v635 = vsel %vm634, %v626, %v631
        %v636 = vmul.f32 %v624, %v635
        %v637 = vperm.slane %v318, 3
        %v638 = vmul.f32 %v636, %v637
        %v639 = vperm.slane %v318, 4
        %v640 = vadd.f32 %v638, %v639
        %v641 = vld [vmem:[%s4] sm:$0xff]
        %v642 = vld [vmem:[%s4 + $0x8] sm:$0xff]
        %v643 = vld [vmem:[%s4 + $0x10] sm:$0xff]
        %v644 = vld [vmem:[%s4 + $0x18] sm:$0xff]
        %v645 = vperm.slane %v318, 5
        %v647 = vsel %vm451, %v640, 0
        %649 = vmatpush.msra.mxu0 0.0
        %650 = vmatpush.msra.mxu0 0.0
        %651 = vmatpush.msra.mxu0 0.0
        %652 = vmatpush.msra.mxu0 0.0
        %653 = vmatpush.msra.mxu0 0.0
        %654 = vmatpush.msra.mxu0 0.0
        %655 = vmatpush.msra.mxu0 0.0
        %656 = vmatpush.msra.mxu0 0.0
        %657 = vmatpush.msra.mxu0 0.0
        %658 = vmatpush.msra.mxu0 0.0
        %659 = vmatpush.msra.mxu0 0.0
        %660 = vmatpush.msra.mxu0 0.0
        %661 = vmatpush.msra.mxu0 %v644
        %662 = vmatpush.msra.mxu0 %v643
        %663 = vmatpush.msra.mxu0 %v642
        %664 = vmatpush.msra.mxu0 %v641
        %665 = vmatmul.f32.gmra.mxu0 %v647
        %v666 = vpop.f32.mrf.mxu0
        %v667 = vadd.f32 %v645, %v666
        %668 = vdwg.mxu0
        %v669 = vxor.u32 %v667, 2147483648
        %v670 = vmul.f32 %v669, 1.442695
        %v671 = vpow.pop %v670
        %v672 = vadd.f32 %v671, 1.0
        %v673 = vrcp.pop %v672
        %v674 = vmul.f32 %v672, %v673
        %v675 = vsub.f32 1.0, %v674
        %v676 = vmul.f32 %v673, %v675
        %v677 = vadd.f32 %v673, %v676
        %vm678 = vweird.f32 %v672
        %vm679 = vweird.f32 %v673
        %vm680 = vmor %vm678, %vm679
        %v681 = vsel %vm680, %v673, %v677
        %v682 = vand.u32 2147483647, %v672
        %vm683 = vcmp.eq.f32.partialorder %v682, 8.507059e+37
        %v684 = vand.u32 %v672, 2147483648
        %v685 = vor.u32 1.1754944e-38, %v684
        %v686 = vsel %vm683, %v685, %v681
        %v687 = vmul.f32 1.0, %v686
        %v688 = vmul.f32 %v667, %v687
        %v689 = vadd.f32 %v611, %v688
        %690 = vst.msk [vmem:[%s309] sm:$0xff] %vm451, %v689
        %s691 = sand.u32 %s208, 1
        %s692 = scalar_lea.sflag [#allocation3], %s691
        %s693 = sand.u32 %s208, 1
        %s694 = smul.addr %s693, 8
        %s695 = scalar_lea.vmem [#allocation2], %s694
        // Predicated region
        $region53: #{tpu_custom_call.1} parent=51 // pred_check
          %p696 = pneg %p218
        $region54: #{tpu_custom_call.1} parent=51 // pred_check_branch
          %698 = sbr.rel (%p696) target = $region56
        $region55: #{tpu_custom_call.1} parent=51 // pred_region
          %700 = vsyncadd %s692, 0
          %s701 = smul.addr %s22, 8
          %s702 = scalar_lea.hbm %s8, %s701
          %s704 = sshll.u32 %s695, 4
          %s705 = int_to_ptr.vmem [resolvable:$true] %s704
          %s706 = sshll.u32 %s702, 4
          %s707 = int_to_ptr.hbm [resolvable:$true] %s706
          %709 = dma.vmem_to_hbm [thread:$0]  %s705, 128, %s707, %s692
        $region56: #{tpu_custom_call.1} parent=51 // pred_fallthru
          _
      $region52: #{tpu_custom_call.1} parent=5 // pred_fallthru
        _
      %p710 = scmp.le.s32.totalorder 2, %s17
      // Predicated region
      $region57: #{tpu_custom_call.1} parent=5 // pred_check
        %p711 = pneg %p710
      $region58: #{tpu_custom_call.1} parent=5 // pred_check_branch
        %713 = sbr.rel (%p711) target = $region60
      $region59: #{tpu_custom_call.1} parent=5 // pred_region
        %s714 = ssub.s32 %s17, 2
        // Predicated region
        $region61: #{tpu_custom_call.1} parent=59 // pred_check
          %p715 = pneg %p224
        $region62: #{tpu_custom_call.1} parent=59 // pred_check_branch
          %717 = sbr.rel (%p715) target = $region64
        $region63: #{tpu_custom_call.1} parent=59 // pred_region
          %s718 = sand.u32 %s209, 1
          %s719 = scalar_lea.sflag [#allocation3], %s718
          %s720 = sand.u32 %s209, 1
          %s721 = smul.addr %s720, 8
          %s722 = scalar_lea.vmem [#allocation2], %s721
          %724 = dma.done %s719, 128
        $region64: #{tpu_custom_call.1} parent=59 // pred_fallthru
          _
      $region60: #{tpu_custom_call.1} parent=5 // pred_fallthru
        _
    $region6: #{tpu_custom_call.1} parent=1 // loop_footer
      %s21 = sadd.s32 1, %s17
    $region7: #{tpu_custom_call.1} parent=1 // loop_footer_branch
      %16 = sbr.rel target = $region3
    $region8: #{tpu_custom_call.1} parent=1 // loop_exit
      _
    %725 = vsyncpa [#allocation3], 1
    %s726 = scalar_lea.sflag [#allocation3], 1
    %727 = vsyncpa %s726, 1

</llo_original>
